<compile_context>
chip_gen: v5e
topology: v5e:2x2
jax: 0.10.0
libtpu: 0.0.40
codegen_flags: <defaults>
</compile_context>

<pallas_src>
import jax
import jax.numpy as jnp
from jax import lax
from jax.experimental import pallas as pl
from jax.experimental.pallas import tpu as pltpu


F = 20              # feature width fixed by the module spec
LANES = 128         # lane-aligned width of the packed parameter block

# Packed parameter layout (row offsets; all sublane-aligned; lanes [0,20) real):
OFF_W2 = 0          # rows [  0,  20): W2 = W_lin @ rand_weight      ((in, out) layout)
OFF_B2 = 24         # row   24       : b2 = b_lin @ rand_weight + 1
OFF_W = 32          # rows [ 32, 160): W_lin, K-padded to 128 rows, real [0:20, 0:20]
OFF_B = 160         # row  160       : b_lin
PACKED_ROWS = 168   # total rows (multiple of 8)


def pack_params(w_lin, b_lin, rand_weight):
    """One-time parameter packing (reusable across calls).

    Pre-fuses Linear#1 with rand_weight and lays everything out lane/sublane
    aligned so the kernel needs a single parameter DMA and no masked loads.
    W_lin is stored K-padded to 128 rows because h2 is produced 128 lanes wide
    (its padded lanes are exactly zero, so the zero rows contribute nothing)."""
    hi = lax.Precision.HIGHEST
    w2 = jnp.matmul(w_lin, rand_weight, precision=hi)          # (20, 20)
    b2 = jnp.matmul(b_lin, rand_weight, precision=hi) + 1.0    # (1, 20)
    p = jnp.zeros((PACKED_ROWS, LANES), jnp.float32)
    p = p.at[OFF_W2:OFF_W2 + F, :F].set(w2)
    p = p.at[OFF_B2, :F].set(b2[0])
    p = p.at[OFF_W:OFF_W + F, :F].set(w_lin)
    p = p.at[OFF_B, :F].set(b_lin[0])
    return p


def _mlp_rows(x, p_ref):
    """Row-independent forward: x (R, 20) -> h3 (R, 128).

    Lanes [20, 128) of the result are exactly zero by construction."""
    w2 = p_ref[OFF_W2:OFF_W2 + F, :]        # (20, 128)  fused Linear+rand_weight
    b2 = p_ref[OFF_B2:OFF_B2 + 1, :]        # (1, 128)   fused bias (incl. the +1)
    w = p_ref[OFF_W:OFF_W + LANES, :]       # (128, 128) Linear weight, K-padded
    b = p_ref[OFF_B:OFF_B + 1, :]           # (1, 128)   Linear bias
    # relu(linear(X) @ rand_weight + 1) with the first Linear pre-fused:
    h2 = jnp.maximum(jnp.dot(x, w2, preferred_element_type=jnp.float32) + b2, 0.0)
    # linear(.) again (shared weights):
    return jnp.dot(h2, w, preferred_element_type=jnp.float32) + b


def _collapse(total, abs_sum):
    """`while |h|.sum() > 1: h /= 2 ; return h.sum()` without a data-dependent
    loop.  Halving by 2 is exact in fp32, so the number of halvings n depends
    only on the exponent of abs_sum:
        abs_sum = m * 2^e, m in [1, 2):  n = e if m == 1 else e + 1;  n = 0 if abs_sum <= 1
    and total * 2^-n equals halving the tensor n times and re-summing exactly
    (power-of-2 scaling commutes with fp rounding; no underflow at these scales)."""
    bits = pltpu.bitcast(abs_sum, jnp.int32)        # sign bit is 0 (abs_sum >= 0)
    e_unbiased = (bits >> 23) - 127
    has_frac = (bits & 0x7FFFFF) != 0
    n = jnp.where(abs_sum > 1.0, e_unbiased + has_frac.astype(jnp.int32), 0)
    # Build 2^-n by exponent-bit assembly, split in two so each factor is normal.
    n1 = n >> 1
    n2 = n - n1
    scale = (pltpu.bitcast((127 - n1) << 23, jnp.float32) *
             pltpu.bitcast((127 - n2) << 23, jnp.float32))
    return total * scale


# ---------------------------------------------------------------------------
# Single evaluation: exactly the module's forward (X: (2, 20) -> scalar).
# ---------------------------------------------------------------------------
def _single_kernel(x_ref, p_ref, out_ref):
    h3 = _mlp_rows(x_ref[...], p_ref)                 # (2, 128)
    abs_sum = jnp.sum(jnp.abs(h3), keepdims=True)     # (1, 1)
    total = jnp.sum(h3, keepdims=True)                # (1, 1)
    out_ref[0, 0] = _collapse(total, abs_sum)[0, 0]


def fixed_hidden_mlp(x, packed_params):
    # Tiny problem: single grid point, whole arrays live in VMEM as one block.
    # No pipelining machinery on purpose (fixed-overhead bound).
    return pl.pallas_call(
        _single_kernel,
        out_shape=jax.ShapeDtypeStruct((1, 1), jnp.float32),
        in_specs=[
            pl.BlockSpec(memory_space=pltpu.VMEM),   # x              (2, 20)
            pl.BlockSpec(memory_space=pltpu.VMEM),   # packed params  (168, 128)
        ],
        out_specs=pl.BlockSpec(memory_space=pltpu.SMEM),  # scalar result
    )(x, packed_params)


# ---------------------------------------------------------------------------
# Batched: N independent (2, 20) inputs -> N scalars in one pallas_call.
# ---------------------------------------------------------------------------
def _batched_kernel(x_ref, p_ref, out_ref):
    # x_ref: (2, TILE, 20) — row r of every eval in this tile lives in x_ref[r],
    # so per-eval reductions become two aligned contiguous row-slices (no
    # awkward (2T,128)->(T,2,128) relayout inside the kernel).
    t = x_ref.shape[1]
    x = jnp.concatenate([x_ref[0], x_ref[1]], axis=0)        # (2T, 20)
    h3 = _mlp_rows(x, p_ref)                                  # (2T, 128)
    row_sum = jnp.sum(h3, axis=1, keepdims=True)              # (2T, 1)
    row_abs = jnp.sum(jnp.abs(h3), axis=1, keepdims=True)     # (2T, 1)
    total = row_sum[:t] + row_sum[t:]                         # (T, 1) per-eval sum
    abs_sum = row_abs[:t] + row_abs[t:]                       # (T, 1) per-eval |.|-sum
    out_ref[...] = _collapse(total, abs_sum)


def fixed_hidden_mlp_batched(xs, packed_params, *, tile=8):
    """Evaluate N independent (2, 20) inputs (xs: (N, 2, 20)) in one call.

    The leading "parallel" grid axis tiles the evals (amortizes launch and
    per-step overhead, shards across v7x's two TensorCores; a no-op on
    v5e/v6e); the params BlockSpec uses a constant index_map so the packed
    block is DMA'd once and stays VMEM-resident.  Raise `tile` (multiple of 8)
    for throughput on large N."""
    n = xs.shape[0]
    assert tile % 8 == 0 and n % tile == 0, (n, tile)
    xs_t = jnp.transpose(xs, (1, 0, 2))                       # (2, N, 20)
    out = pl.pallas_call(
        _batched_kernel,
        out_shape=jax.ShapeDtypeStruct((n, 1), jnp.float32),
        grid=(n // tile,),
        in_specs=[
            pl.BlockSpec((2, tile, F), lambda i: (0, i, 0)),        # eval tile
            pl.BlockSpec((PACKED_ROWS, LANES), lambda i: (0, 0)),   # resident params
        ],
        out_specs=pl.BlockSpec((tile, 1), lambda i: (i, 0)),
        compiler_params=pltpu.CompilerParams(
            dimension_semantics=("parallel",)),
    )(xs_t, packed_params)
    return out[:, 0]


# ---------------------------------------------------------------------------
# Pure-JAX reference (faithful to the PyTorch forward, incl. the while loop).
# ---------------------------------------------------------------------------
def reference(x, w_lin, b_lin, rand_weight):
    h = x @ w_lin + b_lin
    h = jnp.maximum(h @ rand_weight + 1.0, 0.0)
    h = h @ w_lin + b_lin

    def cond(c):
        return jnp.sum(jnp.abs(c)) > 1.0

    def body(c):
        return c / 2.0

    h = lax.while_loop(cond, body, h)
    return jnp.sum(h)


if __name__ == "__main__":
    key = jax.random.PRNGKey(0)
    k_x, k_rw, k_w, k_b, k_xs = jax.random.split(key, 5)

    B = 2
    # Input like torch.rand(2, 20): uniform [0, 1)
    x = jax.random.uniform(k_x, (B, F), dtype=jnp.float32)
    # rand_weight ~ torch.rand((20, 20))
    rand_weight = jax.random.uniform(k_rw, (F, F), dtype=jnp.float32)
    # nn.Linear(20, 20) init: uniform(±1/sqrt(20)); stored as (in, out) so y = x @ W + b
    bound = 1.0 / jnp.sqrt(jnp.float32(F))
    w_lin = jax.random.uniform(k_w, (F, F), dtype=jnp.float32,
                               minval=-bound, maxval=bound)
    b_lin = jax.random.uniform(k_b, (1, F), dtype=jnp.float32,
                               minval=-bound, maxval=bound)

    # One-time parameter packing (fusion + alignment), shared by both entry points.
    packed = pack_params(w_lin, b_lin, rand_weight)

    # --- single evaluation (the module's forward) ---
    out = jax.block_until_ready(fixed_hidden_mlp(x, packed))
    ref = reference(x, w_lin, b_lin, rand_weight)
    assert jnp.allclose(out[0, 0], ref, rtol=1e-5, atol=1e-5), (out, ref)

    # --- batched: many independent (2, 20) evaluations in one pallas_call ---
    N, TILE = 16, 8
    xs = jax.random.uniform(k_xs, (N, B, F), dtype=jnp.float32)
    outs = jax.block_until_ready(fixed_hidden_mlp_batched(xs, packed, tile=TILE))
    refs = jax.vmap(lambda xe: reference(xe, w_lin, b_lin, rand_weight))(xs)
    assert jnp.allclose(outs, refs, rtol=1e-5, atol=1e-5), (outs, refs)

    print("KERNEL_OK")
</pallas_src>

<mosaic_0001>
module attributes {stable_mosaic.version = 11 : i64} {
  func.func @_single_kernel(%arg0: memref<2x20xf32, #tpu.memory_space<vmem>>, %arg1: memref<168x128xf32, #tpu.memory_space<vmem>>, %arg2: memref<1x1xf32, #tpu.memory_space<smem>>) attributes {dimension_semantics = [], scalar_prefetch = 0 : i64, scratch_operands = 0 : i64, tpu.core_type = #tpu.core_type<tc>} {
    %c0 = arith.constant 0 : index
    %c0_0 = arith.constant 0 : index
    %0 = vector.load %arg0[%c0, %c0_0] : memref<2x20xf32, #tpu.memory_space<vmem>>, vector<2x20xf32>
    %c0_1 = arith.constant 0 : index
    %c0_2 = arith.constant 0 : index
    %1 = vector.load %arg1[%c0_1, %c0_2] : memref<168x128xf32, #tpu.memory_space<vmem>>, vector<20x128xf32>
    %c24 = arith.constant 24 : index
    %c0_3 = arith.constant 0 : index
    %2 = vector.load %arg1[%c24, %c0_3] : memref<168x128xf32, #tpu.memory_space<vmem>>, vector<1x128xf32>
    %c32 = arith.constant 32 : index
    %c0_4 = arith.constant 0 : index
    %3 = vector.load %arg1[%c32, %c0_4] : memref<168x128xf32, #tpu.memory_space<vmem>>, vector<128x128xf32>
    %c160 = arith.constant 160 : index
    %c0_5 = arith.constant 0 : index
    %4 = vector.load %arg1[%c160, %c0_5] : memref<168x128xf32, #tpu.memory_space<vmem>>, vector<1x128xf32>
    %cst = arith.constant dense<0.000000e+00> : vector<2x128xf32>
    %5 = tpu.matmul %0, %1, %cst {dimension_numbers = #tpu.dot_dimension_numbers<[1], [0], [0], [1], [0, 0, 1, 1], [], []>} : vector<2x20xf32>, vector<20x128xf32>, vector<2x128xf32> -> vector<2x128xf32>
    %6 = vector.broadcast %2 : vector<1x128xf32> to vector<2x128xf32>
    %7 = arith.addf %5, %6 : vector<2x128xf32>
    %cst_6 = arith.constant 0.000000e+00 : f32
    %8 = vector.broadcast %cst_6 : f32 to vector<2x128xf32>
    %9 = arith.maximumf %7, %8 : vector<2x128xf32>
    %cst_7 = arith.constant dense<0.000000e+00> : vector<2x128xf32>
    %10 = tpu.matmul %9, %3, %cst_7 {dimension_numbers = #tpu.dot_dimension_numbers<[1], [0], [0], [1], [0, 0, 1, 1], [], []>} : vector<2x128xf32>, vector<128x128xf32>, vector<2x128xf32> -> vector<2x128xf32>
    %11 = vector.broadcast %4 : vector<1x128xf32> to vector<2x128xf32>
    %12 = arith.addf %10, %11 : vector<2x128xf32>
    %13 = math.absf %12 : vector<2x128xf32>
    %14 = vector.shape_cast %13 : vector<2x128xf32> to vector<1x2x128xf32>
    %cst_8 = arith.constant dense<0.000000e+00> : vector<1xf32>
    %15 = vector.multi_reduction <add>, %14, %cst_8 [1, 2] : vector<1x2x128xf32> to vector<1xf32>
    %16 = vector.shape_cast %15 : vector<1xf32> to vector<1x1x1xf32>
    %17 = vector.extract %16[0, 0, 0] : f32 from vector<1x1x1xf32>
    %18 = vector.broadcast %17 : f32 to vector<1x1xf32>
    %19 = vector.shape_cast %12 : vector<2x128xf32> to vector<1x2x128xf32>
    %cst_9 = arith.constant dense<0.000000e+00> : vector<1xf32>
    %20 = vector.multi_reduction <add>, %19, %cst_9 [1, 2] : vector<1x2x128xf32> to vector<1xf32>
    %21 = vector.shape_cast %20 : vector<1xf32> to vector<1x1x1xf32>
    %22 = vector.extract %21[0, 0, 0] : f32 from vector<1x1x1xf32>
    %23 = vector.broadcast %22 : f32 to vector<1x1xf32>
    %24 = tpu.bitcast %18 : vector<1x1xf32> -> vector<1x1xi32>
    %c23_i32 = arith.constant 23 : i32
    %25 = vector.broadcast %c23_i32 : i32 to vector<1x1xi32>
    %26 = arith.shrsi %24, %25 : vector<1x1xi32>
    %c127_i32 = arith.constant 127 : i32
    %27 = vector.broadcast %c127_i32 : i32 to vector<1x1xi32>
    %28 = arith.subi %26, %27 : vector<1x1xi32>
    %c8388607_i32 = arith.constant 8388607 : i32
    %29 = vector.broadcast %c8388607_i32 : i32 to vector<1x1xi32>
    %30 = arith.andi %24, %29 : vector<1x1xi32>
    %c0_i32 = arith.constant 0 : i32
    %31 = vector.broadcast %c0_i32 : i32 to vector<1x1xi32>
    %32 = arith.cmpi ne, %30, %31 : vector<1x1xi32>
    %cst_10 = arith.constant 1.000000e+00 : f32
    %33 = vector.broadcast %cst_10 : f32 to vector<1x1xf32>
    %34 = arith.cmpf ogt, %18, %33 : vector<1x1xf32>
    %35 = arith.extui %32 : vector<1x1xi1> to vector<1x1xi32>
    %36 = arith.addi %28, %35 : vector<1x1xi32>
    %c0_i32_11 = arith.constant 0 : i32
    %37 = vector.broadcast %c0_i32_11 : i32 to vector<1x1xi32>
    %38 = arith.select %34, %36, %37 : vector<1x1xi1>, vector<1x1xi32>
    %c1_i32 = arith.constant 1 : i32
    %39 = vector.broadcast %c1_i32 : i32 to vector<1x1xi32>
    %40 = arith.shrsi %38, %39 : vector<1x1xi32>
    %41 = arith.subi %38, %40 : vector<1x1xi32>
    %c127_i32_12 = arith.constant 127 : i32
    %42 = vector.broadcast %c127_i32_12 : i32 to vector<1x1xi32>
    %43 = arith.subi %42, %40 : vector<1x1xi32>
    %c23_i32_13 = arith.constant 23 : i32
    %44 = vector.broadcast %c23_i32_13 : i32 to vector<1x1xi32>
    %45 = arith.shli %43, %44 : vector<1x1xi32>
    %46 = tpu.bitcast %45 : vector<1x1xi32> -> vector<1x1xf32>
    %c127_i32_14 = arith.constant 127 : i32
    %47 = vector.broadcast %c127_i32_14 : i32 to vector<1x1xi32>
    %48 = arith.subi %47, %41 : vector<1x1xi32>
    %c23_i32_15 = arith.constant 23 : i32
    %49 = vector.broadcast %c23_i32_15 : i32 to vector<1x1xi32>
    %50 = arith.shli %48, %49 : vector<1x1xi32>
    %51 = tpu.bitcast %50 : vector<1x1xi32> -> vector<1x1xf32>
    %52 = arith.mulf %46, %51 : vector<1x1xf32>
    %53 = arith.mulf %23, %52 : vector<1x1xf32>
    %54 = vector.extract %53[0, 0] : f32 from vector<1x1xf32>
    %c0_16 = arith.constant 0 : index
    %c0_17 = arith.constant 0 : index
    %55 = memref.load %arg2[%c0_16, %c0_17] : memref<1x1xf32, #tpu.memory_space<smem>>
    memref.store %54, %arg2[%c0_16, %c0_17] : memref<1x1xf32, #tpu.memory_space<smem>>
    return
  }
}

</mosaic_0001>

<llo_original>
// kernel: tpu_custom_call.1
$region0: #{tpu_custom_call.1}
  #allocation0 [shape = 'u32[]', space=smem, size = 0x4, offset = 0x4, fixed_abs, tag = 'smem constant byte address 0x4 - core index']
  #allocation1 [shape = 'u32[72,128]{1,0:T(1,128)}', space=vmem, size = 0x9000, scoped, tag = 'internal scratch']
  %s0 = inlined_call_operand.hbm [shape: f32[2,20], index: 0, kind: input, shape index: {}]
  %s1 = inlined_call_operand.hbm [shape: f32[168,128], index: 1, kind: input, shape index: {}]
  %s2 = inlined_call_operand.hbm [shape: f32[1,1], index: 2, kind: output, shape index: {}]
  %s3 = sld [smem:[#allocation0]]
  $region26: #{tpu_custom_call.1} parent=0
    _
  %s5 = ssub.s32 1, %s3
  %s6 = scalar_select 0, %s5, %s3
  $region1: #{tpu_custom_call.1} parent=0
    #allocation2 [shape = 'u8[1024]{0}', space=vmem, size = 0x400, scoped, tag = 'input window, operand 0, single buffered']
    #allocation3 [shape = 's32[1]{0}', space=sflag, size = 0x4, scoped, tag = 'scoped memory for tpu_custom_call.1']
    #allocation4 [shape = 's32[1]{0}', space=sflag, size = 0x4, scoped, tag = 'scoped memory for tpu_custom_call.1']
    #allocation5 [shape = 'u8[86016]{0}', space=vmem, size = 0x15000, scoped, tag = 'input window, operand 1, single buffered']
    #allocation6 [shape = 's32[1]{0}', space=sflag, size = 0x4, scoped, tag = 'scoped memory for tpu_custom_call.1']
    #allocation7 [shape = 'u8[512]{0}', space=smem, size = 0x200, scoped, tag = 'output window, operand 0, single buffered']
    %7 = vsyncpa [#allocation3], 0
    %8 = vsyncpa [#allocation6], 0
    %9 = vsyncpa [#allocation4], 0
    // Predicated region
    $region2: #{tpu_custom_call.1} parent=1 // pred_check
      _
    $region3: #{tpu_custom_call.1} parent=1 // pred_check_branch
      %11 = sbr.rel (0) target = $region5
    $region4: #{tpu_custom_call.1} parent=1 // pred_region
      %13 = vsyncadd [#allocation3], 0
      %s15 = sshll.u32 %s0, 4
      %s16 = int_to_ptr.hbm [resolvable:$true] %s15
      %s17 = sshll.u32 [#allocation2], 4
      %s18 = int_to_ptr.vmem [resolvable:$true] %s17
      %20 = dma.hbm_to_vmem [thread:$0]  %s16, 32, %s18, [#allocation3]
    $region5: #{tpu_custom_call.1} parent=1 // pred_fallthru
      _
    // Predicated region
    $region6: #{tpu_custom_call.1} parent=1 // pred_check
      _
    $region7: #{tpu_custom_call.1} parent=1 // pred_check_branch
      %22 = sbr.rel (0) target = $region9
    $region8: #{tpu_custom_call.1} parent=1 // pred_region
      %24 = vsyncadd [#allocation6], 0
      %s25 = sshll.u32 %s1, 4
      %s26 = int_to_ptr.hbm [resolvable:$true] %s25
      %s27 = sshll.u32 [#allocation5], 4
      %s28 = int_to_ptr.vmem [resolvable:$true] %s27
      %33 = dma.hbm_to_vmem [thread:$0]  %s26, 2688, %s28, [#allocation6], 128, 128, 8
    $region9: #{tpu_custom_call.1} parent=1 // pred_fallthru
      _
    // Predicated region
    $region10: #{tpu_custom_call.1} parent=1 // pred_check
      _
    $region11: #{tpu_custom_call.1} parent=1 // pred_check_branch
      %35 = sbr.rel (0) target = $region13
    $region12: #{tpu_custom_call.1} parent=1 // pred_region
      %37 = dma.done [#allocation3], 32
    $region13: #{tpu_custom_call.1} parent=1 // pred_fallthru
      _
    // Predicated region
    $region14: #{tpu_custom_call.1} parent=1 // pred_check
      _
    $region15: #{tpu_custom_call.1} parent=1 // pred_check_branch
      %39 = sbr.rel (0) target = $region17
    $region16: #{tpu_custom_call.1} parent=1 // pred_region
      %41 = dma.done [#allocation6], 2688
    $region17: #{tpu_custom_call.1} parent=1 // pred_fallthru
      _
    %v42 = vld [vmem:[#allocation2] sm:$0x3]
    %v43 = vld [vmem:[#allocation5] sm:$0xff]
    %v44 = vld [vmem:[#allocation5 + $0x8] sm:$0xff]
    %v45 = vld [vmem:[#allocation5 + $0x10] sm:$0xf]
    %v46 = vld [vmem:[#allocation5 + $0x18] sm:$0x1]
    %v47 = vld [vmem:[#allocation5 + $0x20] sm:$0xff]
    %v48 = vld [vmem:[#allocation5 + $0x28] sm:$0xff]
    %v49 = vld [vmem:[#allocation5 + $0x30] sm:$0xff]
    %v50 = vld [vmem:[#allocation5 + $0x38] sm:$0xff]
    %v51 = vld [vmem:[#allocation5 + $0x40] sm:$0xff]
    %v52 = vld [vmem:[#allocation5 + $0x48] sm:$0xff]
    %v53 = vld [vmem:[#allocation5 + $0x50] sm:$0xff]
    %v54 = vld [vmem:[#allocation5 + $0x58] sm:$0xff]
    %v55 = vld [vmem:[#allocation5 + $0x60] sm:$0xff]
    %v56 = vld [vmem:[#allocation5 + $0x68] sm:$0xff]
    %v57 = vld [vmem:[#allocation5 + $0x70] sm:$0xff]
    %v58 = vld [vmem:[#allocation5 + $0x78] sm:$0xff]
    %v59 = vld [vmem:[#allocation5 + $0x80] sm:$0xff]
    %v60 = vld [vmem:[#allocation5 + $0x88] sm:$0xff]
    %v61 = vld [vmem:[#allocation5 + $0x90] sm:$0xff]
    %v62 = vld [vmem:[#allocation5 + $0x98] sm:$0xff]
    %v63 = vld [vmem:[#allocation5 + $0xa0] sm:$0x1]
    %v64 = vperm.slane %v46, 0
    %vm65 = vcmask 162816
    %v67 = vsel %vm65, %v42, 0
    %vm69 = vcmask 1043456
    %v71 = vsel %vm69, %v45, 0
    %73 = vmatpush.msra.mxu0 0.0
    %74 = vmatpush.msra.mxu0 0.0
    %75 = vmatpush.msra.mxu0 0.0
    %76 = vmatpush.msra.mxu0 0.0
    %77 = vmatpush.msra.mxu0 0.0
    %78 = vmatpush.msra.mxu0 0.0
    %79 = vmatpush.msra.mxu0 0.0
    %80 = vmatpush.msra.mxu0 0.0
    %81 = vmatpush.msra.mxu0 0.0
    %82 = vmatpush.msra.mxu0 0.0
    %83 = vmatpush.msra.mxu0 0.0
    %84 = vmatpush.msra.mxu0 0.0
    %85 = vmatpush.msra.mxu0 0.0
    %86 = vmatpush.msra.mxu0 %v71
    %87 = vmatpush.msra.mxu0 %v44
    %88 = vmatpush.msra.mxu0 %v43
    %89 = vmatmul.f32.gmra.mxu0 %v67
    %v90 = vpop.f32.mrf.mxu0
    %v91 = vadd.f32 %v64, %v90
    %92 = vdwg.mxu0
    %v93 = vmax.f32 %v91, 0.0
    %v94 = vperm.slane %v63, 0
    %95 = vmatpush.msra.mxu0 %v62
    %96 = vmatpush.msra.mxu0 %v61
    %97 = vmatpush.msra.mxu0 %v60
    %98 = vmatpush.msra.mxu0 %v59
    %99 = vmatpush.msra.mxu0 %v58
    %100 = vmatpush.msra.mxu0 %v57
    %101 = vmatpush.msra.mxu0 %v56
    %102 = vmatpush.msra.mxu0 %v55
    %103 = vmatpush.msra.mxu0 %v54
    %104 = vmatpush.msra.mxu0 %v53
    %105 = vmatpush.msra.mxu0 %v52
    %106 = vmatpush.msra.mxu0 %v51
    %107 = vmatpush.msra.mxu0 %v50
    %108 = vmatpush.msra.mxu0 %v49
    %109 = vmatpush.msra.mxu0 %v48
    %110 = vmatpush.msra.mxu0 %v47
    %111 = vmatmul.f32.gmra.mxu0 %v93
    %v112 = vpop.f32.mrf.mxu0
    %v113 = vadd.f32 %v94, %v112
    %114 = vdwg.mxu0
    %v115 = vand.u32 2147483647, %v113
    %vm116 = vcmask 1041408
    %v117 = vsel %vm116, %v115, 0.0
    %118 = vadd.xlane.f32.xlu0 %v117
    %v119 = vpop.xlane.xlu0 %118
    %v120 = vrot.slane %v119, 4
    %v121 = vadd.f32 %v119, %v120
    %v122 = vrot.slane %v121, 2
    %v123 = vadd.f32 %v121, %v122
    %v124 = vrot.slane %v123, 1
    %v125 = vadd.f32 %v123, %v124
    %s126 = vtos %v125
    %v127 = vstv %s126
    %v128 = vsel %vm116, %v113, 0.0
    %129 = vadd.xlane.f32.xlu0 %v128
    %v130 = vpop.xlane.xlu0 %129
    %v131 = vrot.slane %v130, 4
    %v132 = vadd.f32 %v130, %v131
    %v133 = vrot.slane %v132, 2
    %v134 = vadd.f32 %v132, %v133
    %v135 = vrot.slane %v134, 1
    %v136 = vadd.f32 %v134, %v135
    %s137 = vtos %v136
    %v138 = vstv %s137
    %v140 = vshra.s32 %v127, 23
    %v141 = vsub.s32 %v140, 127
    %v142 = vand.u32 %v127, 8388607
    %vm143 = vcmp.ne.s32.totalorder %v142, 0
    %vm144 = vcmp.gt.f32.partialorder %v127, 1.0
    %v145 = vsel %vm143, 1, 0
    %v146 = vadd.s32 %v141, %v145
    %v147 = vsel %vm144, %v146, 0
    %v148 = vshra.s32 %v147, 1
    %v149 = vsub.s32 %v147, %v148
    %v150 = vsub.s32 127, %v148
    %v151 = vshll.u32 %v150, 23
    %v153 = vsub.s32 127, %v149
    %v154 = vshll.u32 %v153, 23
    %v156 = vmul.f32 %v151, %v154
    %v157 = vmul.f32 %v138, %v156
    %s158 = vtos %v157
    %s159 = scalar_lea.smem [#allocation7], 0
    %160 = sst [smem:[%s159]] %s158
    // Predicated region
    $region18: #{tpu_custom_call.1} parent=1 // pred_check
      _
    $region19: #{tpu_custom_call.1} parent=1 // pred_check_branch
      %162 = sbr.rel (0) target = $region21
    $region20: #{tpu_custom_call.1} parent=1 // pred_region
      %164 = vsyncadd [#allocation4], 0
      %s166 = sshll.u32 %s2, 4
      %s167 = int_to_ptr.hbm [resolvable:$true] %s166
      %169 = dma.smem_to_hbm [#allocation7], 16, %s167, [#allocation4]
    $region21: #{tpu_custom_call.1} parent=1 // pred_fallthru
      _
    // Predicated region
    $region22: #{tpu_custom_call.1} parent=1 // pred_check
      _
    $region23: #{tpu_custom_call.1} parent=1 // pred_check_branch
      %171 = sbr.rel (0) target = $region25
    $region24: #{tpu_custom_call.1} parent=1 // pred_region
      %173 = dma.done [#allocation4], 16
    $region25: #{tpu_custom_call.1} parent=1 // pred_fallthru
      _
    %174 = sfence
    %175 = vsyncpa [#allocation3], 1
    %176 = vsyncpa [#allocation6], 1
    %177 = vsyncpa [#allocation4], 1

</llo_original>
